<compile_context>
chip_gen: v7x
topology: tpu7x:2x2x1
jax: 0.10.0
libtpu: 0.0.40
codegen_flags: <defaults>
</compile_context>

<pallas_src>
from functools import partial

import jax
import jax.numpy as jnp
from jax.experimental import pallas as pl
from jax.experimental.pallas import tpu as pltpu


# ----------------------------------------------------------------------------
# Helpers
# ----------------------------------------------------------------------------
def _tile(n, target=256):
    """Largest tile <= target dividing n (multiple of 8 when actually tiling)."""
    if n <= target:
        return n
    for t in range(target, 7, -8):
        if n % t == 0:
            return t
    return n


# ----------------------------------------------------------------------------
# Projection kernels (row-tiled GEMMs, weights resident via constant index_map)
# ----------------------------------------------------------------------------
def _q_proj_kernel(x_ref, w_ref, b_ref, q_ref, *, scale):
    # TODO(synk): activation of w_q/w_k/w_v/w_o assumed ReLU
    # (get_activation_function unspecified in the PyTorch snippet).
    f32, bf16 = jnp.float32, jnp.bfloat16
    h = jnp.dot(x_ref[...].astype(bf16), w_ref[...].astype(bf16),
                preferred_element_type=f32) + b_ref[...]
    # 1/sqrt(dk) folded into q once, here.
    q_ref[...] = (jnp.maximum(h, 0.0) * f32(scale)).astype(q_ref.dtype)


def _kv_proj_kernel(y_ref, wk_ref, bk_ref, wv_ref, bv_ref, k_ref, v_ref):
    f32, bf16 = jnp.float32, jnp.bfloat16
    yb = y_ref[...].astype(bf16)
    k = jnp.dot(yb, wk_ref[...].astype(bf16), preferred_element_type=f32) + bk_ref[...]
    v = jnp.dot(yb, wv_ref[...].astype(bf16), preferred_element_type=f32) + bv_ref[...]
    k_ref[...] = jnp.maximum(k, 0.0).astype(k_ref.dtype)
    v_ref[...] = jnp.maximum(v, 0.0).astype(v_ref.dtype)


# ----------------------------------------------------------------------------
# Flash-style attention kernel: grid = (batch, q-tile, kv-tile)
# ----------------------------------------------------------------------------
def _attn_kernel(kmask_ref, q_ref, k_ref, v_ref, wo_ref, bo_ref, mvsum_ref,
                 o_ref, m_sc, l_sc, acc_sc, *, num_heads, n_memory):
    f32, bf16 = jnp.float32, jnp.bfloat16
    ki = pl.program_id(2)

    @pl.when(ki == 0)
    def _init():
        m_sc[...] = jnp.full_like(m_sc, -jnp.inf)
        l_sc[...] = jnp.zeros_like(l_sc)
        acc_sc[...] = jnp.zeros_like(acc_sc)

    q = q_ref[...].astype(bf16)          # (H, tq, dk)   (scale already folded)
    k = k_ref[...].astype(bf16)          # (H, tkv, dk)
    v = v_ref[...].astype(bf16)          # (H, tkv, dk)

    # Per-head scores, contraction over dk only (batched over heads).
    s = jnp.einsum('hqd,hkd->hqk', q, k, preferred_element_type=f32)

    # torch masked_fill(mask, 1e-9): masked keys get score exactly 1e-9 (f32).
    fill = kmask_ref[...] != 0           # (1, tkv) -> broadcasts over (H, tq, tkv)
    s = jnp.where(fill, f32(1e-9), s)

    # Online (numerically stable) softmax accumulation in f32.
    m_prev = m_sc[...]
    m_new = jnp.maximum(m_prev, jnp.max(s, axis=-1, keepdims=True))
    alpha = jnp.exp(m_prev - m_new)
    p = jnp.exp(s - m_new)
    l_sc[...] = alpha * l_sc[...] + jnp.sum(p, axis=-1, keepdims=True)
    acc_sc[...] = alpha * acc_sc[...] + jnp.einsum(
        'hqk,hkd->hqd', p.astype(bf16), v, preferred_element_type=f32)
    m_sc[...] = m_new

    @pl.when(ki == pl.num_programs(2) - 1)
    def _finalize():
        m_run = m_sc[...]
        l = l_sc[...]
        acc = acc_sc[...]
        if n_memory > 0:
            # Memory slots: the torch path extends the mask with ones, so every
            # memory score is masked_fill'ed to exactly 1e-9 -> closed form, no
            # memory-key matmul needed.
            # TODO(synk): mask=None path (unmasked memory slots) would need the
            # memory-key score matmul restored.
            m_fin = jnp.maximum(m_run, f32(1e-9))
            a = jnp.exp(m_run - m_fin)
            e_mem = jnp.exp(f32(1e-9) - m_fin)                 # (H, tq, 1)
            l = a * l + f32(n_memory) * e_mem
            acc = a * acc + e_mem * mvsum_ref[...][:, None, :]  # (H, tq, dk)

        inv = pl.reciprocal(l, approx=True)
        heads = (acc * inv).astype(bf16)                        # (H, tq, dk)
        wo = wo_ref[...].astype(bf16)                           # (H, dk, D)

        # Output projection fused here; per-head dk-contraction, f32 accumulate.
        out = jnp.zeros(o_ref.shape, f32)
        for h in range(num_heads):                              # small static H
            out = out + jnp.dot(heads[h], wo[h], preferred_element_type=f32)
        out = jnp.maximum(out + bo_ref[...], 0.0)
        o_ref[...] = out.astype(o_ref.dtype)


# ----------------------------------------------------------------------------
# Wrapper
# ----------------------------------------------------------------------------
def meshed_memory_mha(x, y, mask, params, *, num_heads, d_kqv, is_memory=True):
    f32 = jnp.float32
    if y is None:
        y = x
    B, Lx, D = x.shape
    Ly = y.shape[1]
    H, dk = num_heads, d_kqv
    Hdk = H * dk
    M = params["memory_v"].shape[0] if is_memory else 0

    rows_x, rows_y = B * Lx, B * Ly
    x2 = x.reshape(rows_x, D)
    y2 = y.reshape(rows_y, D)

    # ---- Q projection ------------------------------------------------------
    trx = _tile(rows_x, 512)
    q2 = pl.pallas_call(
        partial(_q_proj_kernel, scale=float(dk) ** -0.5),
        out_shape=jax.ShapeDtypeStruct((rows_x, Hdk), f32),
        grid=(rows_x // trx,),
        in_specs=[pl.BlockSpec((trx, D), lambda i: (i, 0)),
                  pl.BlockSpec((D, Hdk), lambda i: (0, 0)),
                  pl.BlockSpec((1, Hdk), lambda i: (0, 0))],
        out_specs=pl.BlockSpec((trx, Hdk), lambda i: (i, 0)),
        compiler_params=pltpu.CompilerParams(dimension_semantics=("parallel",)),
    )(x2, params["wq"], params["bq"])

    # ---- fused K / V projection (y rows loaded once) ------------------------
    try_ = _tile(rows_y, 512)
    k2, v2 = pl.pallas_call(
        _kv_proj_kernel,
        out_shape=(jax.ShapeDtypeStruct((rows_y, Hdk), f32),
                   jax.ShapeDtypeStruct((rows_y, Hdk), f32)),
        grid=(rows_y // try_,),
        in_specs=[pl.BlockSpec((try_, D), lambda i: (i, 0)),
                  pl.BlockSpec((D, Hdk), lambda i: (0, 0)),
                  pl.BlockSpec((1, Hdk), lambda i: (0, 0)),
                  pl.BlockSpec((D, Hdk), lambda i: (0, 0)),
                  pl.BlockSpec((1, Hdk), lambda i: (0, 0))],
        out_specs=(pl.BlockSpec((try_, Hdk), lambda i: (i, 0)),
                   pl.BlockSpec((try_, Hdk), lambda i: (i, 0))),
        compiler_params=pltpu.CompilerParams(dimension_semantics=("parallel",)),
    )(y2, params["wk"], params["bk"], params["wv"], params["bv"])

    # Layout plumbing (XLA): head-major so in-kernel contraction is dk-only.
    q4 = q2.reshape(B, Lx, H, dk).transpose(0, 2, 1, 3)   # (B, H, Lx, dk)
    k4 = k2.reshape(B, Ly, H, dk).transpose(0, 2, 1, 3)
    v4 = v2.reshape(B, Ly, H, dk).transpose(0, 2, 1, 3)

    # O(N) key mask instead of an O(N^2) mask matrix.
    kmask = mask.astype(jnp.int32).reshape(B, 1, Ly)

    wo_r = params["wo"].reshape(H, dk, D)
    bo = params["bo"]
    if is_memory:
        mv_colsum = params["memory_v"].reshape(M, H, dk).sum(axis=0)   # (H, dk)
    else:
        mv_colsum = jnp.zeros((H, dk), f32)

    tq = _tile(Lx, 256)
    tkv = _tile(Ly, 256)
    grid = (B, Lx // tq, Ly // tkv)

    out = pl.pallas_call(
        partial(_attn_kernel, num_heads=H, n_memory=M),
        out_shape=jax.ShapeDtypeStruct((B, Lx, D), x.dtype),
        grid=grid,
        in_specs=[
            pl.BlockSpec((None, 1, tkv), lambda b, qi, ki: (b, 0, ki)),
            pl.BlockSpec((None, H, tq, dk), lambda b, qi, ki: (b, 0, qi, 0)),
            pl.BlockSpec((None, H, tkv, dk), lambda b, qi, ki: (b, 0, ki, 0)),
            pl.BlockSpec((None, H, tkv, dk), lambda b, qi, ki: (b, 0, ki, 0)),
            pl.BlockSpec((H, dk, D), lambda b, qi, ki: (0, 0, 0)),
            pl.BlockSpec((1, D), lambda b, qi, ki: (0, 0)),
            pl.BlockSpec((H, dk), lambda b, qi, ki: (0, 0)),
        ],
        out_specs=pl.BlockSpec((None, tq, D), lambda b, qi, ki: (b, qi, 0)),
        scratch_shapes=[pltpu.VMEM((H, tq, 1), f32),
                        pltpu.VMEM((H, tq, 1), f32),
                        pltpu.VMEM((H, tq, dk), f32)],
        compiler_params=pltpu.CompilerParams(
            # batch / q-tile independent (v7x megacore); kv is the reduction.
            dimension_semantics=("parallel", "parallel", "arbitrary"),
            # above the 32 MiB scoped default, with headroom under v7x's 64 MiB.
            vmem_limit_bytes=48 * 1024 * 1024),
    )(kmask, q4, k4, v4, wo_r, bo, mv_colsum)
    return out


# ----------------------------------------------------------------------------
# Pure-JAX references
# ----------------------------------------------------------------------------
def reference(x, y, mask, params, *, num_heads, d_kqv):
    """Torch-faithful f32 reference (eval mode, ReLU activation)."""
    relu = lambda t: jnp.maximum(t, 0.0)
    B, Lx, _ = x.shape
    Ly = y.shape[1]
    M = params["memory_k"].shape[0]

    q = relu(x @ params["wq"] + params["bq"]).reshape(B, Lx, num_heads, d_kqv)
    k = relu(y @ params["wk"] + params["bk"]).reshape(B, Ly, num_heads, d_kqv)
    v = relu(y @ params["wv"] + params["bv"]).reshape(B, Ly, num_heads, d_kqv)

    mk = jnp.broadcast_to(params["memory_k"].reshape(1, M, num_heads, d_kqv),
                          (B, M, num_heads, d_kqv))
    mv = jnp.broadcast_to(params["memory_v"].reshape(1, M, num_heads, d_kqv),
                          (B, M, num_heads, d_kqv))
    kc = jnp.concatenate([k, mk], axis=1)
    vc = jnp.concatenate([v, mv], axis=1)
    mask_ext = jnp.concatenate([mask, jnp.ones((B, M), dtype=bool)], axis=1)

    outs = []
    for h in range(num_heads):
        att = jnp.einsum("bqd,bkd->bqk", q[:, :, h, :], kc[:, :, h, :]) * (d_kqv ** -0.5)
        att = jnp.where(mask_ext[:, None, :], jnp.float32(1e-9), att)
        m = jnp.max(att, axis=-1, keepdims=True)
        e = jnp.exp(att - m)
        att = e / jnp.sum(e, axis=-1, keepdims=True)
        outs.append(jnp.einsum("bqk,bkd->bqd", att, vc[:, :, h, :]))
    out = jnp.stack(outs, axis=2).reshape(B, Lx, num_heads * d_kqv)
    return relu(out @ params["wo"] + params["bo"])


def reference_matched(x, y, mask, params, *, num_heads, d_kqv):
    """Mirrors the kernel's bf16-at-MXU-boundary casting and memory closed form
    (tight numerical check of the kernel math)."""
    f32, bf16 = jnp.float32, jnp.bfloat16
    relu = lambda t: jnp.maximum(t, 0.0)
    B, Lx, D = x.shape
    Ly = y.shape[1]
    H, dk = num_heads, d_kqv
    M = params["memory_v"].shape[0]
    dot = lambda a, b: jnp.dot(a.astype(bf16), b.astype(bf16),
                               preferred_element_type=f32)

    q = relu(dot(x.reshape(B * Lx, D), params["wq"]) + params["bq"]) * f32(dk ** -0.5)
    k = relu(dot(y.reshape(B * Ly, D), params["wk"]) + params["bk"])
    v = relu(dot(y.reshape(B * Ly, D), params["wv"]) + params["bv"])
    q = q.reshape(B, Lx, H, dk).transpose(0, 2, 1, 3)
    k = k.reshape(B, Ly, H, dk).transpose(0, 2, 1, 3)
    v = v.reshape(B, Ly, H, dk).transpose(0, 2, 1, 3)

    s = jnp.einsum('bhqd,bhkd->bhqk', q.astype(bf16), k.astype(bf16),
                   preferred_element_type=f32)
    s = jnp.where(mask[:, None, None, :], f32(1e-9), s)
    m = jnp.maximum(jnp.max(s, -1, keepdims=True), f32(1e-9))
    e_self = jnp.exp(s - m)
    e_mem = jnp.exp(f32(1e-9) - m)
    denom = jnp.sum(e_self, -1, keepdims=True) + M * e_mem
    mvsum = params["memory_v"].reshape(M, H, dk).sum(axis=0)
    pv = jnp.einsum('bhqk,bhkd->bhqd', e_self.astype(bf16), v.astype(bf16),
                    preferred_element_type=f32)
    heads = (pv + e_mem * mvsum[None, :, None, :]) / denom
    heads2 = heads.transpose(0, 2, 1, 3).reshape(B * Lx, H * dk)
    out = relu(dot(heads2, params["wo"]) + params["bo"])
    return out.reshape(B, Lx, D)


# ----------------------------------------------------------------------------
# Main
# ----------------------------------------------------------------------------
if __name__ == "__main__":
    B, L, d_model = 2, 8, 32
    num_heads, d_kqv = 4, 8
    n_memory = 40
    Hdk = num_heads * d_kqv

    key = jax.random.PRNGKey(0)
    ks = jax.random.split(key, 12)

    def xavier(k, shape):
        fan_in, fan_out = shape[0], shape[1]
        lim = (6.0 / (fan_in + fan_out)) ** 0.5
        return jax.random.uniform(k, shape, jnp.float32, -lim, lim)

    params = {
        "wq": xavier(ks[0], (d_model, Hdk)), "bq": jnp.zeros((1, Hdk), jnp.float32),
        "wk": xavier(ks[1], (d_model, Hdk)), "bk": jnp.zeros((1, Hdk), jnp.float32),
        "wv": xavier(ks[2], (d_model, Hdk)), "bv": jnp.zeros((1, Hdk), jnp.float32),
        "wo": xavier(ks[3], (Hdk, d_model)), "bo": jnp.zeros((1, d_model), jnp.float32),
        # memory_k / memory_v conceptually (1, 40, H, dk); stored flattened as (40, H*dk)
        "memory_k": xavier(ks[4], (n_memory, Hdk)),
        "memory_v": xavier(ks[5], (n_memory, Hdk)),
    }

    x = jax.random.normal(ks[6], (B, L, d_model), jnp.float32)
    mask = jax.random.bernoulli(ks[7], 0.25, (B, L))   # True = masked position

    out = meshed_memory_mha(x, None, mask, params, num_heads=num_heads, d_kqv=d_kqv)
    out = jax.block_until_ready(out)
    assert out.shape == (B, L, d_model)

    # Tight check vs. a reference that mirrors the kernel's casting choices
    # (residual differences: approx reciprocal, accumulation order).
    ref_m = reference_matched(x, x, mask, params, num_heads=num_heads, d_kqv=d_kqv)
    assert jnp.allclose(out, ref_m, atol=1e-2, rtol=1e-2), \
        float(jnp.max(jnp.abs(out - ref_m)))

    # Looser check vs. the torch-faithful f32 reference (bf16 MXU operands).
    ref = reference(x, x, mask, params, num_heads=num_heads, d_kqv=d_kqv)
    assert jnp.allclose(out, ref, atol=7e-2, rtol=7e-2), \
        float(jnp.max(jnp.abs(out - ref)))

    print("KERNEL_OK")
</pallas_src>

<mosaic_0001>
module attributes {stable_mosaic.version = 11 : i64} {
  func.func @_q_proj_kernel(%arg0: i32, %arg1: memref<16x32xf32, #tpu.memory_space<vmem>>, %arg2: memref<32x32xf32, #tpu.memory_space<vmem>>, %arg3: memref<1x32xf32, #tpu.memory_space<vmem>>, %arg4: memref<16x32xf32, #tpu.memory_space<vmem>>) attributes {dimension_semantics = [#tpu.dimension_semantics<parallel>], iteration_bounds = array<i64: 1>, scalar_prefetch = 0 : i64, scratch_operands = 0 : i64, tpu.core_type = #tpu.core_type<tc>, window_params = [{transform_indices = @transform_0, window_bounds = array<i64: 16, 32>}, {pipeline_mode = #tpu.pipeline_mode<synchronous>, transform_indices = @transform_1, window_bounds = array<i64: 32, 32>}, {pipeline_mode = #tpu.pipeline_mode<synchronous>, transform_indices = @transform_2, window_bounds = array<i64: 1, 32>}, {transform_indices = @transform_3, window_bounds = array<i64: 16, 32>}]} {
    %c0 = arith.constant 0 : index
    %c0_0 = arith.constant 0 : index
    %0 = vector.load %arg1[%c0, %c0_0] : memref<16x32xf32, #tpu.memory_space<vmem>>, vector<16x32xf32>
    %1 = arith.truncf %0 : vector<16x32xf32> to vector<16x32xbf16>
    %c0_1 = arith.constant 0 : index
    %c0_2 = arith.constant 0 : index
    %2 = vector.load %arg2[%c0_1, %c0_2] : memref<32x32xf32, #tpu.memory_space<vmem>>, vector<32x32xf32>
    %3 = arith.truncf %2 : vector<32x32xf32> to vector<32x32xbf16>
    %cst = arith.constant dense<0.000000e+00> : vector<16x32xf32>
    %4 = tpu.matmul %1, %3, %cst {dimension_numbers = #tpu.dot_dimension_numbers<[1], [0], [0], [1], [0, 0, 1, 1], [], []>} : vector<16x32xbf16>, vector<32x32xbf16>, vector<16x32xf32> -> vector<16x32xf32>
    %c0_3 = arith.constant 0 : index
    %c0_4 = arith.constant 0 : index
    %5 = vector.load %arg3[%c0_3, %c0_4] : memref<1x32xf32, #tpu.memory_space<vmem>>, vector<1x32xf32>
    %6 = vector.broadcast %5 : vector<1x32xf32> to vector<16x32xf32>
    %7 = arith.addf %4, %6 : vector<16x32xf32>
    %cst_5 = arith.constant 0.000000e+00 : f32
    %8 = vector.broadcast %cst_5 : f32 to vector<16x32xf32>
    %9 = arith.maximumf %7, %8 : vector<16x32xf32>
    %cst_6 = arith.constant 0.353553385 : f32
    %10 = vector.broadcast %cst_6 : f32 to vector<16x32xf32>
    %11 = arith.mulf %9, %10 : vector<16x32xf32>
    %c0_7 = arith.constant 0 : index
    %c0_8 = arith.constant 0 : index
    %12 = vector.load %arg4[%c0_7, %c0_8] : memref<16x32xf32, #tpu.memory_space<vmem>>, vector<16x32xf32>
    tpu.vector_store %arg4[%c0_7, %c0_8], %11 {strides = array<i32>} : memref<16x32xf32, #tpu.memory_space<vmem>>, vector<16x32xf32>,
    return
  }
  func.func @transform_0(%arg0: i32) -> (i32, i32) {
    %c0_i32 = arith.constant 0 : i32
    %c0_i32_0 = arith.constant 0 : i32
    return %arg0, %c0_i32 : i32, i32
  }
  func.func @transform_1(%arg0: i32) -> (i32, i32) {
    %c0_i32 = arith.constant 0 : i32
    %c0_i32_0 = arith.constant 0 : i32
    %c0_i32_1 = arith.constant 0 : i32
    return %c0_i32, %c0_i32_0 : i32, i32
  }
  func.func @transform_2(%arg0: i32) -> (i32, i32) {
    %c0_i32 = arith.constant 0 : i32
    %c0_i32_0 = arith.constant 0 : i32
    %c0_i32_1 = arith.constant 0 : i32
    return %c0_i32, %c0_i32_0 : i32, i32
  }
  func.func @transform_3(%arg0: i32) -> (i32, i32) {
    %c0_i32 = arith.constant 0 : i32
    %c0_i32_0 = arith.constant 0 : i32
    return %arg0, %c0_i32 : i32, i32
  }
}

</mosaic_0001>

<llo_original>
// kernel: tpu_custom_call.1
$region0: #{tpu_custom_call.1}
  #allocation0 [shape = 'u32[]', space=smem, size = 0x4, offset = 0x4, fixed_abs, tag = 'smem constant byte address 0x4 - core index']
  #allocation1 [shape = 'u32[144,128]{1,0:T(1,128)}', space=vmem, size = 0x12000, scoped, tag = 'internal scratch']
  %s0 = inlined_call_operand.hbm [shape: f32[16,32], index: 0, kind: input, shape index: {}]
  %s1 = inlined_call_operand.hbm [shape: f32[32,32], index: 1, kind: input, shape index: {}]
  %s2 = inlined_call_operand.vmem [shape: f32[1,32], index: 2, kind: input, shape index: {}]
  %s3 = inlined_call_operand.hbm [shape: f32[16,32], index: 3, kind: output, shape index: {}]
  %s4 = sld [smem:[#allocation0]]
  $region30: #{tpu_custom_call.1} parent=0
    _
  %s6 = ssub.s32 1, %s4
  %s7 = scalar_select 0, %s6, %s4
  $region1: #{tpu_custom_call.1} parent=0
    #allocation2 [shape = 'u8[8192]{0}', space=vmem, size = 0x2000, scoped, tag = 'input window, operand 0, single buffered']
    #allocation3 [shape = 's32[1]{0}', space=sflag, size = 0x4, scoped, tag = 'scoped memory for tpu_custom_call.1']
    #allocation4 [shape = 's32[1]{0}', space=sflag, size = 0x4, scoped, tag = 'scoped memory for tpu_custom_call.1']
    #allocation5 [shape = 'u8[16384]{0}', space=vmem, size = 0x4000, scoped, tag = 'input window, operand 1, single buffered']
    #allocation6 [shape = 's32[1]{0}', space=sflag, size = 0x4, scoped, tag = 'scoped memory for tpu_custom_call.1']
    #allocation7 [shape = 'u8[8192]{0}', space=vmem, size = 0x2000, scoped, tag = 'output window, operand 0, single buffered']
    %8 = vsyncpa [#allocation3], 0
    %9 = vsyncpa [#allocation6], 0
    %10 = vsyncpa [#allocation4], 0
    // Predicated region
    $region2: #{tpu_custom_call.1} parent=1 // pred_check
      _
    $region3: #{tpu_custom_call.1} parent=1 // pred_check_branch
      %12 = sbr.rel (0) target = $region5
    $region4: #{tpu_custom_call.1} parent=1 // pred_region
      %s14 = ssub.s32 256, 256
      %15 = vsyncadd [#allocation3], %s14
      %s16 = sshll.u32 [#allocation2], 4
      %s17 = int_to_ptr.vmem [resolvable:$true] %s16
      %22 = dma.hbm_to_vmem [thread:$0]  %s0, 256, %s17, [#allocation3], 128, 128, 8
    $region5: #{tpu_custom_call.1} parent=1 // pred_fallthru
      _
    // Predicated region
    $region6: #{tpu_custom_call.1} parent=1 // pred_check
      _
    $region7: #{tpu_custom_call.1} parent=1 // pred_check_branch
      %24 = sbr.rel (0) target = $region9
    $region8: #{tpu_custom_call.1} parent=1 // pred_region
      %s26 = ssub.s32 512, 512
      %27 = vsyncadd [#allocation6], %s26
      %s28 = sshll.u32 [#allocation5], 4
      %s29 = int_to_ptr.vmem [resolvable:$true] %s28
      %34 = dma.hbm_to_vmem [thread:$0]  %s1, 512, %s29, [#allocation6], 128, 128, 8
    $region9: #{tpu_custom_call.1} parent=1 // pred_fallthru
      _
    // Predicated region
    $region10: #{tpu_custom_call.1} parent=1 // pred_check
      _
    $region11: #{tpu_custom_call.1} parent=1 // pred_check_branch
      %36 = sbr.rel (0) target = $region13
    $region12: #{tpu_custom_call.1} parent=1 // pred_region
      _
    $region13: #{tpu_custom_call.1} parent=1 // pred_fallthru
      _
    // Predicated region
    $region14: #{tpu_custom_call.1} parent=1 // pred_check
      _
    $region15: #{tpu_custom_call.1} parent=1 // pred_check_branch
      %38 = sbr.rel (0) target = $region17
    $region16: #{tpu_custom_call.1} parent=1 // pred_region
      %39 = dma.done [#allocation3], 256
    $region17: #{tpu_custom_call.1} parent=1 // pred_fallthru
      _
    // Predicated region
    $region18: #{tpu_custom_call.1} parent=1 // pred_check
      _
    $region19: #{tpu_custom_call.1} parent=1 // pred_check_branch
      %41 = sbr.rel (0) target = $region21
    $region20: #{tpu_custom_call.1} parent=1 // pred_region
      %42 = dma.done [#allocation6], 512
    $region21: #{tpu_custom_call.1} parent=1 // pred_fallthru
      _
    %v44 = vld [vmem:[#allocation2] sm:$0xff]
    %v45 = vld [vmem:[#allocation2 + $0x8] sm:$0xff]
    %v46 = vpack.c.bf16 %v45, %v44
    %v47 = vld [vmem:[#allocation5] sm:$0xff]
    %v48 = vld [vmem:[#allocation5 + $0x8] sm:$0xff]
    %v49 = vld [vmem:[#allocation5 + $0x10] sm:$0xff]
    %v50 = vld [vmem:[#allocation5 + $0x18] sm:$0xff]
    %v51 = vpack.c.bf16 %v48, %v47
    %v52 = vpack.c.bf16 %v50, %v49
    %v53 = vld [vmem:[%s2] sm:$0x1]
    %v55 = vlaneseq
    %v56 = vshrl.u32 %v55, 7
    %v57 = vsub.s32 0, %v56
    %v58 = vrot.slane %v53, %v57
    %vm60 = vcmask 261120
    %v62 = vsel %vm60, %v46, 0
    %64 = vmatprep.subr.bf16.mxu0 0
    %65 = vmatpush1.bf16.msra.mxu0 %v51
    %66 = vmatprep.subr.bf16.mxu0 0
    %67 = vmatpush1.bf16.msra.mxu0 %v52
    %68 = vmatprep.subr.bf16.mxu0 0
    %69 = vmatpush1.bf16.msra.mxu0 0
    %70 = vmatprep.subr.bf16.mxu0 0
    %71 = vmatpush1.bf16.msra.mxu0 0
    %72 = vmatprep.subr.bf16.mxu0 0
    %73 = vmatpush1.bf16.msra.mxu0 0
    %74 = vmatprep.subr.bf16.mxu0 0
    %75 = vmatpush1.bf16.msra.mxu0 0
    %76 = vmatprep.subr.bf16.mxu0 0
    %77 = vmatpush1.bf16.msra.mxu0 0
    %78 = vmatprep.subr.bf16.mxu0 0
    %79 = vmatpush1.bf16.msra.mxu0 0
    %80 = vmatprep.subr.bf16.mxu0 0
    %81 = vmatpush1.bf16.msra.mxu0 0
    %82 = vmatprep.subr.bf16.mxu0 0
    %83 = vmatpush1.bf16.msra.mxu0 0
    %84 = vmatprep.subr.bf16.mxu0 0
    %85 = vmatpush1.bf16.msra.mxu0 0
    %86 = vmatprep.subr.bf16.mxu0 0
    %87 = vmatpush1.bf16.msra.mxu0 0
    %88 = vmatprep.subr.bf16.mxu0 0
    %89 = vmatpush1.bf16.msra.mxu0 0
    %90 = vmatprep.subr.bf16.mxu0 0
    %91 = vmatpush1.bf16.msra.mxu0 0
    %92 = vmatprep.subr.bf16.mxu0 0
    %93 = vmatpush1.bf16.msra.mxu0 0
    %94 = vmatprep.subr.bf16.mxu0 0
    %95 = vmatpush1.bf16.msra.mxu0 0
    %96 = vmatprep.mubr.bf16.mxu0 0
    %97 = vmatmul.mubr.bf16.gmra.mrb[0].mxu0 %v62
    %v98 = vpop.f32.mrb[0].mxu0
    %v99 = vadd.f32 %v58, %v98
    %v100 = vpop.f32.mrb[0].mxu0
    %v101 = vpop.f32.mrb[0].mxu0
    %v102 = vadd.f32 %v58, %v101
    %v103 = vpop.f32.mrb[0].mxu0
    %104 = vdwg.mxu0
    %v105 = vmax.f32 %v99, 0.0
    %v106 = vmax.f32 %v102, 0.0
    %v107 = vmul.f32 %v105, 0.35355338
    %v108 = vmul.f32 %v106, 0.35355338
    %109 = vst.msk [vmem:[#allocation7] sm:$0xff] %vm60, %v107
    %110 = vst.msk [vmem:[#allocation7 + $0x8] sm:$0xff] %vm60, %v108
    // Predicated region
    $region22: #{tpu_custom_call.1} parent=1 // pred_check
      _
    $region23: #{tpu_custom_call.1} parent=1 // pred_check_branch
      %112 = sbr.rel (0) target = $region25
    $region24: #{tpu_custom_call.1} parent=1 // pred_region
      %s114 = ssub.s32 256, 256
      %115 = vsyncadd [#allocation4], %s114
      %s116 = sshll.u32 [#allocation7], 4
      %s117 = int_to_ptr.vmem [resolvable:$true] %s116
      %122 = dma.vmem_to_hbm [thread:$0]  %s117, 256, %s3, [#allocation4], 128, 128, 8
    $region25: #{tpu_custom_call.1} parent=1 // pred_fallthru
      _
    // Predicated region
    $region26: #{tpu_custom_call.1} parent=1 // pred_check
      _
    $region27: #{tpu_custom_call.1} parent=1 // pred_check_branch
      %124 = sbr.rel (0) target = $region29
    $region28: #{tpu_custom_call.1} parent=1 // pred_region
      %125 = dma.done [#allocation4], 256
    $region29: #{tpu_custom_call.1} parent=1 // pred_fallthru
      _
    %126 = vsyncpa [#allocation3], 1
    %127 = vsyncpa [#allocation6], 1
    %128 = vsyncpa [#allocation4], 1

</llo_original>
